<compile_context>
chip_gen: v7x
topology: tpu7x:2x2x1
jax: 0.10.0
libtpu: 0.0.40
codegen_flags: <defaults>
</compile_context>

<pallas_src>
import jax
import jax.numpy as jnp
from jax.experimental import pallas as pl
from jax.experimental.pallas import tpu as pltpu

IN_DIM = 3
HID_DIM = 15
OUT_DIM = 5


def mlp_kernel(x_ref, w1_ref, b1_ref, w2_ref, b2_ref, o_ref):
    x = x_ref[...]          # (IN_DIM, TILE_B)   batch on lanes
    w1 = w1_ref[...]        # (HID_DIM, IN_DIM)  torch layout
    b1 = b1_ref[...]        # (HID_DIM, 1)
    w2 = w2_ref[...]        # (OUT_DIM, HID_DIM)
    b2 = b2_ref[...]        # (OUT_DIM, 1)

    # fc1: h[j, n] = sum_k w1[j, k] * x[k, n] + b1[j]   -- 3-term VPU broadcast-FMA.
    h = b1 + w1[:, 0:1] * x[0:1, :]
    for k in range(1, IN_DIM):
        h = h + w1[:, k:k + 1] * x[k:k + 1, :]
    h = jnp.maximum(h, 0.0)  # ReLU

    # fc2: logits[j, n] = sum_k w2[j, k] * h[k, n] + b2[j] -- 15-term VPU FMA.
    logits = b2 + w2[:, 0:1] * h[0:1, :]
    for k in range(1, HID_DIM):
        logits = logits + w2[:, k:k + 1] * h[k:k + 1, :]

    # Softmax over the 5 feature sublanes (torch Softmax(dim=1)), numerically stable.
    m = logits[0:1, :]
    for j in range(1, OUT_DIM):
        m = jnp.maximum(m, logits[j:j + 1, :])
    e = jnp.exp(logits - m)
    s = e[0:1, :]
    for j in range(1, OUT_DIM):
        s = s + e[j:j + 1, :]
    # Exact divide (kernel is DMA-bound; keeps row sums == 1 to fp32 precision).
    o_ref[...] = e / s


def neural_net_forward(x, w1, b1, w2, b2, *, max_tile_b=2048):
    """x: (B, 3) f32; w1: (15, 3); b1: (15,); w2: (5, 15); b2: (5,)  (torch layouts)."""
    B = x.shape[0]
    # Lane-dense batch tile: multiple of 128 lanes, capped so double-buffered
    # x/out tiles stay far below even v7x's 32 MiB scoped VMEM budget.
    tile_b = min(max_tile_b, ((B + 127) // 128) * 128)
    b_pad = ((B + tile_b - 1) // tile_b) * tile_b        # pad ragged tail with zeros
    grid = (b_pad // tile_b,)

    # Layout plumbing in the wrapper: batch on lanes, features on sublanes.
    x_t = jnp.zeros((IN_DIM, b_pad), jnp.float32).at[:, :B].set(x.T)
    b1_2d = b1.reshape(HID_DIM, 1).astype(jnp.float32)
    b2_2d = b2.reshape(OUT_DIM, 1).astype(jnp.float32)

    cost = pl.CostEstimate(
        flops=2 * b_pad * (IN_DIM * HID_DIM + HID_DIM * OUT_DIM),
        transcendentals=b_pad * OUT_DIM,
        bytes_accessed=4 * (b_pad * (IN_DIM + OUT_DIM)
                            + HID_DIM * IN_DIM + HID_DIM
                            + OUT_DIM * HID_DIM + OUT_DIM),
    )

    out_t = pl.pallas_call(
        mlp_kernel,
        out_shape=jax.ShapeDtypeStruct((OUT_DIM, b_pad), jnp.float32),
        grid=grid,
        in_specs=[
            pl.BlockSpec((IN_DIM, tile_b), lambda i: (0, i)),    # x: tiled along lanes
            pl.BlockSpec((HID_DIM, IN_DIM), lambda i: (0, 0)),   # w1: resident
            pl.BlockSpec((HID_DIM, 1), lambda i: (0, 0)),        # b1: resident
            pl.BlockSpec((OUT_DIM, HID_DIM), lambda i: (0, 0)),  # w2: resident
            pl.BlockSpec((OUT_DIM, 1), lambda i: (0, 0)),        # b2: resident
        ],
        out_specs=pl.BlockSpec((OUT_DIM, tile_b), lambda i: (0, i)),
        compiler_params=pltpu.CompilerParams(
            dimension_semantics=("parallel",),      # v7x: shard batch tiles over 2 TCs
            vmem_limit_bytes=32 * 1024 * 1024,      # lift v5e's 16 MiB default scoped limit
        ),
        cost_estimate=cost,
    )(x_t, w1.astype(jnp.float32), b1_2d, w2.astype(jnp.float32), b2_2d)

    return out_t[:, :B].T                           # back to (B, OUT_DIM)


if __name__ == "__main__":
    key = jax.random.PRNGKey(0)
    k_x, k_w1, k_b1, k_w2, k_b2 = jax.random.split(key, 5)

    B = 8
    x = jax.random.normal(k_x, (B, IN_DIM), dtype=jnp.float32)

    # Deterministic param init (torch.nn.Linear-style uniform(-1/sqrt(fan_in), 1/sqrt(fan_in))).
    bound1 = 1.0 / (IN_DIM ** 0.5)
    w1 = jax.random.uniform(k_w1, (HID_DIM, IN_DIM), jnp.float32, -bound1, bound1)
    b1 = jax.random.uniform(k_b1, (HID_DIM,), jnp.float32, -bound1, bound1)
    bound2 = 1.0 / (HID_DIM ** 0.5)
    w2 = jax.random.uniform(k_w2, (OUT_DIM, HID_DIM), jnp.float32, -bound2, bound2)
    b2 = jax.random.uniform(k_b2, (OUT_DIM,), jnp.float32, -bound2, bound2)

    out = neural_net_forward(x, w1, b1, w2, b2)
    out = jax.block_until_ready(out)

    # Pure-JAX reference of the torch forward pass.
    ref_h = jnp.maximum(x @ w1.T + b1, 0.0)
    ref_logits = ref_h @ w2.T + b2
    ref = jax.nn.softmax(ref_logits, axis=1)
    assert out.shape == (B, OUT_DIM)
    assert jnp.allclose(out, ref, atol=1e-5, rtol=1e-5)
    assert jnp.allclose(jnp.sum(out, axis=1), 1.0, atol=1e-5)

    print("KERNEL_OK")
</pallas_src>

<mosaic_0001>
module attributes {stable_mosaic.version = 11 : i64} {
  func.func @mlp_kernel(%arg0: i32, %arg1: memref<3x128xf32, #tpu.memory_space<vmem>>, %arg2: memref<15x3xf32, #tpu.memory_space<vmem>>, %arg3: memref<15x1xf32, #tpu.memory_space<vmem>>, %arg4: memref<5x15xf32, #tpu.memory_space<vmem>>, %arg5: memref<5x1xf32, #tpu.memory_space<vmem>>, %arg6: memref<5x128xf32, #tpu.memory_space<vmem>>) attributes {dimension_semantics = [#tpu.dimension_semantics<parallel>], iteration_bounds = array<i64: 1>, scalar_prefetch = 0 : i64, scratch_operands = 0 : i64, tpu.core_type = #tpu.core_type<tc>, window_params = [{transform_indices = @transform_0, window_bounds = array<i64: 3, 128>}, {pipeline_mode = #tpu.pipeline_mode<synchronous>, transform_indices = @transform_1, window_bounds = array<i64: 15, 3>}, {pipeline_mode = #tpu.pipeline_mode<synchronous>, transform_indices = @transform_2, window_bounds = array<i64: 15, 1>}, {pipeline_mode = #tpu.pipeline_mode<synchronous>, transform_indices = @transform_3, window_bounds = array<i64: 5, 15>}, {pipeline_mode = #tpu.pipeline_mode<synchronous>, transform_indices = @transform_4, window_bounds = array<i64: 5, 1>}, {transform_indices = @transform_5, window_bounds = array<i64: 5, 128>}]} {
    %c0 = arith.constant 0 : index
    %c0_0 = arith.constant 0 : index
    %0 = vector.load %arg1[%c0, %c0_0] : memref<3x128xf32, #tpu.memory_space<vmem>>, vector<3x128xf32>
    %c0_1 = arith.constant 0 : index
    %c0_2 = arith.constant 0 : index
    %1 = vector.load %arg2[%c0_1, %c0_2] : memref<15x3xf32, #tpu.memory_space<vmem>>, vector<15x3xf32>
    %c0_3 = arith.constant 0 : index
    %c0_4 = arith.constant 0 : index
    %2 = vector.load %arg3[%c0_3, %c0_4] : memref<15x1xf32, #tpu.memory_space<vmem>>, vector<15x1xf32>
    %c0_5 = arith.constant 0 : index
    %c0_6 = arith.constant 0 : index
    %3 = vector.load %arg4[%c0_5, %c0_6] : memref<5x15xf32, #tpu.memory_space<vmem>>, vector<5x15xf32>
    %c0_7 = arith.constant 0 : index
    %c0_8 = arith.constant 0 : index
    %4 = vector.load %arg5[%c0_7, %c0_8] : memref<5x1xf32, #tpu.memory_space<vmem>>, vector<5x1xf32>
    %5 = vector.extract_strided_slice %1 {offsets = [0, 0], sizes = [15, 1], strides = [1, 1]} : vector<15x3xf32> to vector<15x1xf32>
    %6 = vector.extract_strided_slice %0 {offsets = [0, 0], sizes = [1, 128], strides = [1, 1]} : vector<3x128xf32> to vector<1x128xf32>
    %7 = vector.broadcast %5 : vector<15x1xf32> to vector<15x128xf32>
    %8 = vector.broadcast %6 : vector<1x128xf32> to vector<15x128xf32>
    %9 = arith.mulf %7, %8 : vector<15x128xf32>
    %10 = vector.broadcast %2 : vector<15x1xf32> to vector<15x128xf32>
    %11 = arith.addf %10, %9 : vector<15x128xf32>
    %12 = vector.extract_strided_slice %1 {offsets = [0, 1], sizes = [15, 1], strides = [1, 1]} : vector<15x3xf32> to vector<15x1xf32>
    %13 = vector.extract_strided_slice %0 {offsets = [1, 0], sizes = [1, 128], strides = [1, 1]} : vector<3x128xf32> to vector<1x128xf32>
    %14 = vector.broadcast %12 : vector<15x1xf32> to vector<15x128xf32>
    %15 = vector.broadcast %13 : vector<1x128xf32> to vector<15x128xf32>
    %16 = arith.mulf %14, %15 : vector<15x128xf32>
    %17 = arith.addf %11, %16 : vector<15x128xf32>
    %18 = vector.extract_strided_slice %1 {offsets = [0, 2], sizes = [15, 1], strides = [1, 1]} : vector<15x3xf32> to vector<15x1xf32>
    %19 = vector.extract_strided_slice %0 {offsets = [2, 0], sizes = [1, 128], strides = [1, 1]} : vector<3x128xf32> to vector<1x128xf32>
    %20 = vector.broadcast %18 : vector<15x1xf32> to vector<15x128xf32>
    %21 = vector.broadcast %19 : vector<1x128xf32> to vector<15x128xf32>
    %22 = arith.mulf %20, %21 : vector<15x128xf32>
    %23 = arith.addf %17, %22 : vector<15x128xf32>
    %cst = arith.constant 0.000000e+00 : f32
    %24 = vector.broadcast %cst : f32 to vector<15x128xf32>
    %25 = arith.maximumf %23, %24 : vector<15x128xf32>
    %26 = vector.extract_strided_slice %3 {offsets = [0, 0], sizes = [5, 1], strides = [1, 1]} : vector<5x15xf32> to vector<5x1xf32>
    %27 = vector.extract_strided_slice %25 {offsets = [0, 0], sizes = [1, 128], strides = [1, 1]} : vector<15x128xf32> to vector<1x128xf32>
    %28 = vector.broadcast %26 : vector<5x1xf32> to vector<5x128xf32>
    %29 = vector.broadcast %27 : vector<1x128xf32> to vector<5x128xf32>
    %30 = arith.mulf %28, %29 : vector<5x128xf32>
    %31 = vector.broadcast %4 : vector<5x1xf32> to vector<5x128xf32>
    %32 = arith.addf %31, %30 : vector<5x128xf32>
    %33 = vector.extract_strided_slice %3 {offsets = [0, 1], sizes = [5, 1], strides = [1, 1]} : vector<5x15xf32> to vector<5x1xf32>
    %34 = vector.extract_strided_slice %25 {offsets = [1, 0], sizes = [1, 128], strides = [1, 1]} : vector<15x128xf32> to vector<1x128xf32>
    %35 = vector.broadcast %33 : vector<5x1xf32> to vector<5x128xf32>
    %36 = vector.broadcast %34 : vector<1x128xf32> to vector<5x128xf32>
    %37 = arith.mulf %35, %36 : vector<5x128xf32>
    %38 = arith.addf %32, %37 : vector<5x128xf32>
    %39 = vector.extract_strided_slice %3 {offsets = [0, 2], sizes = [5, 1], strides = [1, 1]} : vector<5x15xf32> to vector<5x1xf32>
    %40 = vector.extract_strided_slice %25 {offsets = [2, 0], sizes = [1, 128], strides = [1, 1]} : vector<15x128xf32> to vector<1x128xf32>
    %41 = vector.broadcast %39 : vector<5x1xf32> to vector<5x128xf32>
    %42 = vector.broadcast %40 : vector<1x128xf32> to vector<5x128xf32>
    %43 = arith.mulf %41, %42 : vector<5x128xf32>
    %44 = arith.addf %38, %43 : vector<5x128xf32>
    %45 = vector.extract_strided_slice %3 {offsets = [0, 3], sizes = [5, 1], strides = [1, 1]} : vector<5x15xf32> to vector<5x1xf32>
    %46 = vector.extract_strided_slice %25 {offsets = [3, 0], sizes = [1, 128], strides = [1, 1]} : vector<15x128xf32> to vector<1x128xf32>
    %47 = vector.broadcast %45 : vector<5x1xf32> to vector<5x128xf32>
    %48 = vector.broadcast %46 : vector<1x128xf32> to vector<5x128xf32>
    %49 = arith.mulf %47, %48 : vector<5x128xf32>
    %50 = arith.addf %44, %49 : vector<5x128xf32>
    %51 = vector.extract_strided_slice %3 {offsets = [0, 4], sizes = [5, 1], strides = [1, 1]} : vector<5x15xf32> to vector<5x1xf32>
    %52 = vector.extract_strided_slice %25 {offsets = [4, 0], sizes = [1, 128], strides = [1, 1]} : vector<15x128xf32> to vector<1x128xf32>
    %53 = vector.broadcast %51 : vector<5x1xf32> to vector<5x128xf32>
    %54 = vector.broadcast %52 : vector<1x128xf32> to vector<5x128xf32>
    %55 = arith.mulf %53, %54 : vector<5x128xf32>
    %56 = arith.addf %50, %55 : vector<5x128xf32>
    %57 = vector.extract_strided_slice %3 {offsets = [0, 5], sizes = [5, 1], strides = [1, 1]} : vector<5x15xf32> to vector<5x1xf32>
    %58 = vector.extract_strided_slice %25 {offsets = [5, 0], sizes = [1, 128], strides = [1, 1]} : vector<15x128xf32> to vector<1x128xf32>
    %59 = vector.broadcast %57 : vector<5x1xf32> to vector<5x128xf32>
    %60 = vector.broadcast %58 : vector<1x128xf32> to vector<5x128xf32>
    %61 = arith.mulf %59, %60 : vector<5x128xf32>
    %62 = arith.addf %56, %61 : vector<5x128xf32>
    %63 = vector.extract_strided_slice %3 {offsets = [0, 6], sizes = [5, 1], strides = [1, 1]} : vector<5x15xf32> to vector<5x1xf32>
    %64 = vector.extract_strided_slice %25 {offsets = [6, 0], sizes = [1, 128], strides = [1, 1]} : vector<15x128xf32> to vector<1x128xf32>
    %65 = vector.broadcast %63 : vector<5x1xf32> to vector<5x128xf32>
    %66 = vector.broadcast %64 : vector<1x128xf32> to vector<5x128xf32>
    %67 = arith.mulf %65, %66 : vector<5x128xf32>
    %68 = arith.addf %62, %67 : vector<5x128xf32>
    %69 = vector.extract_strided_slice %3 {offsets = [0, 7], sizes = [5, 1], strides = [1, 1]} : vector<5x15xf32> to vector<5x1xf32>
    %70 = vector.extract_strided_slice %25 {offsets = [7, 0], sizes = [1, 128], strides = [1, 1]} : vector<15x128xf32> to vector<1x128xf32>
    %71 = vector.broadcast %69 : vector<5x1xf32> to vector<5x128xf32>
    %72 = vector.broadcast %70 : vector<1x128xf32> to vector<5x128xf32>
    %73 = arith.mulf %71, %72 : vector<5x128xf32>
    %74 = arith.addf %68, %73 : vector<5x128xf32>
    %75 = vector.extract_strided_slice %3 {offsets = [0, 8], sizes = [5, 1], strides = [1, 1]} : vector<5x15xf32> to vector<5x1xf32>
    %76 = vector.extract_strided_slice %25 {offsets = [8, 0], sizes = [1, 128], strides = [1, 1]} : vector<15x128xf32> to vector<1x128xf32>
    %77 = vector.broadcast %75 : vector<5x1xf32> to vector<5x128xf32>
    %78 = vector.broadcast %76 : vector<1x128xf32> to vector<5x128xf32>
    %79 = arith.mulf %77, %78 : vector<5x128xf32>
    %80 = arith.addf %74, %79 : vector<5x128xf32>
    %81 = vector.extract_strided_slice %3 {offsets = [0, 9], sizes = [5, 1], strides = [1, 1]} : vector<5x15xf32> to vector<5x1xf32>
    %82 = vector.extract_strided_slice %25 {offsets = [9, 0], sizes = [1, 128], strides = [1, 1]} : vector<15x128xf32> to vector<1x128xf32>
    %83 = vector.broadcast %81 : vector<5x1xf32> to vector<5x128xf32>
    %84 = vector.broadcast %82 : vector<1x128xf32> to vector<5x128xf32>
    %85 = arith.mulf %83, %84 : vector<5x128xf32>
    %86 = arith.addf %80, %85 : vector<5x128xf32>
    %87 = vector.extract_strided_slice %3 {offsets = [0, 10], sizes = [5, 1], strides = [1, 1]} : vector<5x15xf32> to vector<5x1xf32>
    %88 = vector.extract_strided_slice %25 {offsets = [10, 0], sizes = [1, 128], strides = [1, 1]} : vector<15x128xf32> to vector<1x128xf32>
    %89 = vector.broadcast %87 : vector<5x1xf32> to vector<5x128xf32>
    %90 = vector.broadcast %88 : vector<1x128xf32> to vector<5x128xf32>
    %91 = arith.mulf %89, %90 : vector<5x128xf32>
    %92 = arith.addf %86, %91 : vector<5x128xf32>
    %93 = vector.extract_strided_slice %3 {offsets = [0, 11], sizes = [5, 1], strides = [1, 1]} : vector<5x15xf32> to vector<5x1xf32>
    %94 = vector.extract_strided_slice %25 {offsets = [11, 0], sizes = [1, 128], strides = [1, 1]} : vector<15x128xf32> to vector<1x128xf32>
    %95 = vector.broadcast %93 : vector<5x1xf32> to vector<5x128xf32>
    %96 = vector.broadcast %94 : vector<1x128xf32> to vector<5x128xf32>
    %97 = arith.mulf %95, %96 : vector<5x128xf32>
    %98 = arith.addf %92, %97 : vector<5x128xf32>
    %99 = vector.extract_strided_slice %3 {offsets = [0, 12], sizes = [5, 1], strides = [1, 1]} : vector<5x15xf32> to vector<5x1xf32>
    %100 = vector.extract_strided_slice %25 {offsets = [12, 0], sizes = [1, 128], strides = [1, 1]} : vector<15x128xf32> to vector<1x128xf32>
    %101 = vector.broadcast %99 : vector<5x1xf32> to vector<5x128xf32>
    %102 = vector.broadcast %100 : vector<1x128xf32> to vector<5x128xf32>
    %103 = arith.mulf %101, %102 : vector<5x128xf32>
    %104 = arith.addf %98, %103 : vector<5x128xf32>
    %105 = vector.extract_strided_slice %3 {offsets = [0, 13], sizes = [5, 1], strides = [1, 1]} : vector<5x15xf32> to vector<5x1xf32>
    %106 = vector.extract_strided_slice %25 {offsets = [13, 0], sizes = [1, 128], strides = [1, 1]} : vector<15x128xf32> to vector<1x128xf32>
    %107 = vector.broadcast %105 : vector<5x1xf32> to vector<5x128xf32>
    %108 = vector.broadcast %106 : vector<1x128xf32> to vector<5x128xf32>
    %109 = arith.mulf %107, %108 : vector<5x128xf32>
    %110 = arith.addf %104, %109 : vector<5x128xf32>
    %111 = vector.extract_strided_slice %3 {offsets = [0, 14], sizes = [5, 1], strides = [1, 1]} : vector<5x15xf32> to vector<5x1xf32>
    %112 = vector.extract_strided_slice %25 {offsets = [14, 0], sizes = [1, 128], strides = [1, 1]} : vector<15x128xf32> to vector<1x128xf32>
    %113 = vector.broadcast %111 : vector<5x1xf32> to vector<5x128xf32>
    %114 = vector.broadcast %112 : vector<1x128xf32> to vector<5x128xf32>
    %115 = arith.mulf %113, %114 : vector<5x128xf32>
    %116 = arith.addf %110, %115 : vector<5x128xf32>
    %117 = vector.extract_strided_slice %116 {offsets = [0, 0], sizes = [1, 128], strides = [1, 1]} : vector<5x128xf32> to vector<1x128xf32>
    %118 = vector.extract_strided_slice %116 {offsets = [1, 0], sizes = [1, 128], strides = [1, 1]} : vector<5x128xf32> to vector<1x128xf32>
    %119 = arith.maximumf %117, %118 : vector<1x128xf32>
    %120 = vector.extract_strided_slice %116 {offsets = [2, 0], sizes = [1, 128], strides = [1, 1]} : vector<5x128xf32> to vector<1x128xf32>
    %121 = arith.maximumf %119, %120 : vector<1x128xf32>
    %122 = vector.extract_strided_slice %116 {offsets = [3, 0], sizes = [1, 128], strides = [1, 1]} : vector<5x128xf32> to vector<1x128xf32>
    %123 = arith.maximumf %121, %122 : vector<1x128xf32>
    %124 = vector.extract_strided_slice %116 {offsets = [4, 0], sizes = [1, 128], strides = [1, 1]} : vector<5x128xf32> to vector<1x128xf32>
    %125 = arith.maximumf %123, %124 : vector<1x128xf32>
    %126 = vector.broadcast %125 : vector<1x128xf32> to vector<5x128xf32>
    %127 = arith.subf %116, %126 : vector<5x128xf32>
    %128 = math.exp %127 : vector<5x128xf32>
    %129 = vector.extract_strided_slice %128 {offsets = [0, 0], sizes = [1, 128], strides = [1, 1]} : vector<5x128xf32> to vector<1x128xf32>
    %130 = vector.extract_strided_slice %128 {offsets = [1, 0], sizes = [1, 128], strides = [1, 1]} : vector<5x128xf32> to vector<1x128xf32>
    %131 = arith.addf %129, %130 : vector<1x128xf32>
    %132 = vector.extract_strided_slice %128 {offsets = [2, 0], sizes = [1, 128], strides = [1, 1]} : vector<5x128xf32> to vector<1x128xf32>
    %133 = arith.addf %131, %132 : vector<1x128xf32>
    %134 = vector.extract_strided_slice %128 {offsets = [3, 0], sizes = [1, 128], strides = [1, 1]} : vector<5x128xf32> to vector<1x128xf32>
    %135 = arith.addf %133, %134 : vector<1x128xf32>
    %136 = vector.extract_strided_slice %128 {offsets = [4, 0], sizes = [1, 128], strides = [1, 1]} : vector<5x128xf32> to vector<1x128xf32>
    %137 = arith.addf %135, %136 : vector<1x128xf32>
    %138 = vector.broadcast %137 : vector<1x128xf32> to vector<5x128xf32>
    %139 = arith.divf %128, %138 : vector<5x128xf32>
    %c0_9 = arith.constant 0 : index
    %c0_10 = arith.constant 0 : index
    %140 = vector.load %arg6[%c0_9, %c0_10] : memref<5x128xf32, #tpu.memory_space<vmem>>, vector<5x128xf32>
    tpu.vector_store %arg6[%c0_9, %c0_10], %139 {strides = array<i32>} : memref<5x128xf32, #tpu.memory_space<vmem>>, vector<5x128xf32>,
    return
  }
  func.func @transform_0(%arg0: i32) -> (i32, i32) {
    %c0_i32 = arith.constant 0 : i32
    %c0_i32_0 = arith.constant 0 : i32
    return %c0_i32, %arg0 : i32, i32
  }
  func.func @transform_1(%arg0: i32) -> (i32, i32) {
    %c0_i32 = arith.constant 0 : i32
    %c0_i32_0 = arith.constant 0 : i32
    %c0_i32_1 = arith.constant 0 : i32
    return %c0_i32, %c0_i32_0 : i32, i32
  }
  func.func @transform_2(%arg0: i32) -> (i32, i32) {
    %c0_i32 = arith.constant 0 : i32
    %c0_i32_0 = arith.constant 0 : i32
    %c0_i32_1 = arith.constant 0 : i32
    return %c0_i32, %c0_i32_0 : i32, i32
  }
  func.func @transform_3(%arg0: i32) -> (i32, i32) {
    %c0_i32 = arith.constant 0 : i32
    %c0_i32_0 = arith.constant 0 : i32
    %c0_i32_1 = arith.constant 0 : i32
    return %c0_i32, %c0_i32_0 : i32, i32
  }
  func.func @transform_4(%arg0: i32) -> (i32, i32) {
    %c0_i32 = arith.constant 0 : i32
    %c0_i32_0 = arith.constant 0 : i32
    %c0_i32_1 = arith.constant 0 : i32
    return %c0_i32, %c0_i32_0 : i32, i32
  }
  func.func @transform_5(%arg0: i32) -> (i32, i32) {
    %c0_i32 = arith.constant 0 : i32
    %c0_i32_0 = arith.constant 0 : i32
    return %c0_i32, %arg0 : i32, i32
  }
}

</mosaic_0001>

<llo_original>
// kernel: tpu_custom_call.1
$region0: #{tpu_custom_call.1}
  #allocation0 [shape = 'u32[]', space=smem, size = 0x4, offset = 0x4, fixed_abs, tag = 'smem constant byte address 0x4 - core index']
  #allocation1 [shape = 'u32[144,128]{1,0:T(1,128)}', space=vmem, size = 0x12000, scoped, tag = 'internal scratch']
  %s0 = inlined_call_operand.vmem [shape: f32[3,128], index: 0, kind: input, shape index: {}]
  %s1 = inlined_call_operand.vmem [shape: f32[15,3], index: 1, kind: input, shape index: {}]
  %s2 = inlined_call_operand.vmem [shape: f32[15,1], index: 2, kind: input, shape index: {}]
  %s3 = inlined_call_operand.vmem [shape: f32[5,15], index: 3, kind: input, shape index: {}]
  %s4 = inlined_call_operand.vmem [shape: f32[5,1], index: 4, kind: input, shape index: {}]
  %s5 = inlined_call_operand.hbm [shape: f32[5,128], index: 5, kind: output, shape index: {}]
  %s6 = sld [smem:[#allocation0]]
  $region30: #{tpu_custom_call.1} parent=0
    _
  %s8 = ssub.s32 1, %s6
  %s9 = scalar_select 0, %s8, %s6
  $region1: #{tpu_custom_call.1} parent=0
    #allocation2 [shape = 'u8[4096]{0}', space=vmem, size = 0x1000, scoped, tag = 'output window, operand 0, single buffered']
    #allocation3 [shape = 's32[1]{0}', space=sflag, size = 0x4, scoped, tag = 'scoped memory for tpu_custom_call.1']
    %10 = vsyncpa [#allocation3], 0
    // Predicated region
    $region2: #{tpu_custom_call.1} parent=1 // pred_check
      _
    $region3: #{tpu_custom_call.1} parent=1 // pred_check_branch
      %12 = sbr.rel (0) target = $region5
    $region4: #{tpu_custom_call.1} parent=1 // pred_region
      _
    $region5: #{tpu_custom_call.1} parent=1 // pred_fallthru
      _
    // Predicated region
    $region6: #{tpu_custom_call.1} parent=1 // pred_check
      _
    $region7: #{tpu_custom_call.1} parent=1 // pred_check_branch
      %14 = sbr.rel (0) target = $region9
    $region8: #{tpu_custom_call.1} parent=1 // pred_region
      _
    $region9: #{tpu_custom_call.1} parent=1 // pred_fallthru
      _
    // Predicated region
    $region10: #{tpu_custom_call.1} parent=1 // pred_check
      _
    $region11: #{tpu_custom_call.1} parent=1 // pred_check_branch
      %16 = sbr.rel (0) target = $region13
    $region12: #{tpu_custom_call.1} parent=1 // pred_region
      _
    $region13: #{tpu_custom_call.1} parent=1 // pred_fallthru
      _
    // Predicated region
    $region14: #{tpu_custom_call.1} parent=1 // pred_check
      _
    $region15: #{tpu_custom_call.1} parent=1 // pred_check_branch
      %18 = sbr.rel (0) target = $region17
    $region16: #{tpu_custom_call.1} parent=1 // pred_region
      _
    $region17: #{tpu_custom_call.1} parent=1 // pred_fallthru
      _
    // Predicated region
    $region18: #{tpu_custom_call.1} parent=1 // pred_check
      _
    $region19: #{tpu_custom_call.1} parent=1 // pred_check_branch
      %20 = sbr.rel (0) target = $region21
    $region20: #{tpu_custom_call.1} parent=1 // pred_region
      _
    $region21: #{tpu_custom_call.1} parent=1 // pred_fallthru
      _
    %v21 = vld [vmem:[%s0] sm:$0x7]
    %v22 = vld [vmem:[%s1] sm:$0xff]
    %v23 = vld [vmem:[%s1 + $0x8] sm:$0x7f]
    %v24 = vld [vmem:[%s2] sm:$0xff]
    %v25 = vld [vmem:[%s2 + $0x8] sm:$0x7f]
    %v26 = vld [vmem:[%s3] sm:$0x1f]
    %v27 = vld [vmem:[%s4] sm:$0x1f]
    %29 = vset.pattern.permute.xlu0 0
    %30 = vperm.xlu0 %29, %v22
    %v31 = vpop.permute.xlu0 %30
    %34 = vset.pattern.permute.xlu0 0
    %35 = vperm.xlu0 %34, %v23
    %v36 = vpop.permute.xlu0 %35
    %v38 = vlaneseq
    %v39 = vshrl.u32 %v38, 7
    %v40 = vsub.s32 0, %v39
    %v41 = vrot.slane %v21, %v40
    %v42 = vmul.f32 %v31, %v41
    %v43 = vmul.f32 %v36, %v41
    %45 = vset.pattern.permute.xlu0 0
    %46 = vperm.xlu0 %45, %v24
    %v47 = vpop.permute.xlu0 %46
    %50 = vset.pattern.permute.xlu0 0
    %51 = vperm.xlu0 %50, %v25
    %v52 = vpop.permute.xlu0 %51
    %v54 = vadd.f32 %v47, %v42
    %v55 = vadd.f32 %v52, %v43
    %56 = vset.pattern.permute.xlu0 1
    %57 = vperm.xlu0 %56, %v22
    %v58 = vpop.permute.xlu0 %57
    %60 = vset.pattern.permute.xlu0 1
    %61 = vperm.xlu0 %60, %v23
    %v62 = vpop.permute.xlu0 %61
    %v64 = vlaneseq
    %v65 = vshrl.u32 %v64, 7
    %v66 = vsub.s32 1, %v65
    %v67 = vrot.slane %v21, %v66
    %v68 = vmul.f32 %v58, %v67
    %v69 = vmul.f32 %v62, %v67
    %v70 = vadd.f32 %v54, %v68
    %v71 = vadd.f32 %v55, %v69
    %72 = vset.pattern.permute.xlu0 2
    %73 = vperm.xlu0 %72, %v22
    %v74 = vpop.permute.xlu0 %73
    %76 = vset.pattern.permute.xlu0 2
    %77 = vperm.xlu0 %76, %v23
    %v78 = vpop.permute.xlu0 %77
    %v80 = vlaneseq
    %v81 = vshrl.u32 %v80, 7
    %v82 = vsub.s32 2, %v81
    %v83 = vrot.slane %v21, %v82
    %v84 = vmul.f32 %v74, %v83
    %v85 = vmul.f32 %v78, %v83
    %v86 = vadd.f32 %v70, %v84
    %v87 = vadd.f32 %v71, %v85
    %v88 = vmax.f32 %v86, 0.0
    %v89 = vmax.f32 %v87, 0.0
    %91 = vset.pattern.permute.xlu0 0
    %92 = vperm.xlu0 %91, %v26
    %v93 = vpop.permute.xlu0 %92
    %v95 = vlaneseq
    %v96 = vshrl.u32 %v95, 7
    %v97 = vsub.s32 0, %v96
    %v98 = vrot.slane %v88, %v97
    %v99 = vmul.f32 %v93, %v98
    %101 = vset.pattern.permute.xlu0 0
    %102 = vperm.xlu0 %101, %v27
    %v103 = vpop.permute.xlu0 %102
    %v105 = vadd.f32 %v103, %v99
    %106 = vset.pattern.permute.xlu0 1
    %107 = vperm.xlu0 %106, %v26
    %v108 = vpop.permute.xlu0 %107
    %v110 = vlaneseq
    %v111 = vshrl.u32 %v110, 7
    %v112 = vsub.s32 1, %v111
    %v113 = vrot.slane %v88, %v112
    %v114 = vmul.f32 %v108, %v113
    %v115 = vadd.f32 %v105, %v114
    %116 = vset.pattern.permute.xlu0 2
    %117 = vperm.xlu0 %116, %v26
    %v118 = vpop.permute.xlu0 %117
    %v120 = vlaneseq
    %v121 = vshrl.u32 %v120, 7
    %v122 = vsub.s32 2, %v121
    %v123 = vrot.slane %v88, %v122
    %v124 = vmul.f32 %v118, %v123
    %v125 = vadd.f32 %v115, %v124
    %126 = vset.pattern.permute.xlu0 3
    %127 = vperm.xlu0 %126, %v26
    %v128 = vpop.permute.xlu0 %127
    %v130 = vlaneseq
    %v131 = vshrl.u32 %v130, 7
    %v132 = vsub.s32 3, %v131
    %v133 = vrot.slane %v88, %v132
    %v134 = vmul.f32 %v128, %v133
    %v135 = vadd.f32 %v125, %v134
    %136 = vset.pattern.permute.xlu0 4
    %137 = vperm.xlu0 %136, %v26
    %v138 = vpop.permute.xlu0 %137
    %v140 = vlaneseq
    %v141 = vshrl.u32 %v140, 7
    %v142 = vsub.s32 4, %v141
    %v143 = vrot.slane %v88, %v142
    %v144 = vmul.f32 %v138, %v143
    %v145 = vadd.f32 %v135, %v144
    %146 = vset.pattern.permute.xlu0 5
    %147 = vperm.xlu0 %146, %v26
    %v148 = vpop.permute.xlu0 %147
    %v150 = vlaneseq
    %v151 = vshrl.u32 %v150, 7
    %v152 = vsub.s32 5, %v151
    %v153 = vrot.slane %v88, %v152
    %v154 = vmul.f32 %v148, %v153
    %v155 = vadd.f32 %v145, %v154
    %156 = vset.pattern.permute.xlu0 6
    %157 = vperm.xlu0 %156, %v26
    %v158 = vpop.permute.xlu0 %157
    %v160 = vlaneseq
    %v161 = vshrl.u32 %v160, 7
    %v162 = vsub.s32 6, %v161
    %v163 = vrot.slane %v88, %v162
    %v164 = vmul.f32 %v158, %v163
    %v165 = vadd.f32 %v155, %v164
    %166 = vset.pattern.permute.xlu0 7
    %167 = vperm.xlu0 %166, %v26
    %v168 = vpop.permute.xlu0 %167
    %v170 = vlaneseq
    %v171 = vshrl.u32 %v170, 7
    %v172 = vsub.s32 7, %v171
    %v173 = vrot.slane %v88, %v172
    %v174 = vmul.f32 %v168, %v173
    %v175 = vadd.f32 %v165, %v174
    %176 = vset.pattern.permute.xlu0 8
    %177 = vperm.xlu0 %176, %v26
    %v178 = vpop.permute.xlu0 %177
    %v180 = vlaneseq
    %v181 = vshrl.u32 %v180, 7
    %v182 = vsub.s32 0, %v181
    %v183 = vrot.slane %v89, %v182
    %v184 = vmul.f32 %v178, %v183
    %v185 = vadd.f32 %v175, %v184
    %186 = vset.pattern.permute.xlu0 9
    %187 = vperm.xlu0 %186, %v26
    %v188 = vpop.permute.xlu0 %187
    %v190 = vlaneseq
    %v191 = vshrl.u32 %v190, 7
    %v192 = vsub.s32 1, %v191
    %v193 = vrot.slane %v89, %v192
    %v194 = vmul.f32 %v188, %v193
    %v195 = vadd.f32 %v185, %v194
    %196 = vset.pattern.permute.xlu0 10
    %197 = vperm.xlu0 %196, %v26
    %v198 = vpop.permute.xlu0 %197
    %v200 = vlaneseq
    %v201 = vshrl.u32 %v200, 7
    %v202 = vsub.s32 2, %v201
    %v203 = vrot.slane %v89, %v202
    %v204 = vmul.f32 %v198, %v203
    %v205 = vadd.f32 %v195, %v204
    %206 = vset.pattern.permute.xlu0 11
    %207 = vperm.xlu0 %206, %v26
    %v208 = vpop.permute.xlu0 %207
    %v210 = vlaneseq
    %v211 = vshrl.u32 %v210, 7
    %v212 = vsub.s32 3, %v211
    %v213 = vrot.slane %v89, %v212
    %v214 = vmul.f32 %v208, %v213
    %v215 = vadd.f32 %v205, %v214
    %216 = vset.pattern.permute.xlu0 12
    %217 = vperm.xlu0 %216, %v26
    %v218 = vpop.permute.xlu0 %217
    %v220 = vlaneseq
    %v221 = vshrl.u32 %v220, 7
    %v222 = vsub.s32 4, %v221
    %v223 = vrot.slane %v89, %v222
    %v224 = vmul.f32 %v218, %v223
    %v225 = vadd.f32 %v215, %v224
    %226 = vset.pattern.permute.xlu0 13
    %227 = vperm.xlu0 %226, %v26
    %v228 = vpop.permute.xlu0 %227
    %v230 = vlaneseq
    %v231 = vshrl.u32 %v230, 7
    %v232 = vsub.s32 5, %v231
    %v233 = vrot.slane %v89, %v232
    %v234 = vmul.f32 %v228, %v233
    %v235 = vadd.f32 %v225, %v234
    %236 = vset.pattern.permute.xlu0 14
    %237 = vperm.xlu0 %236, %v26
    %v238 = vpop.permute.xlu0 %237
    %v240 = vlaneseq
    %v241 = vshrl.u32 %v240, 7
    %v242 = vsub.s32 6, %v241
    %v243 = vrot.slane %v89, %v242
    %v244 = vmul.f32 %v238, %v243
    %v245 = vadd.f32 %v235, %v244
    %v247 = vrot.slane %v245, 1
    %v249 = vmax.f32 %v245, %v247
    %v250 = vrot.slane %v245, 2
    %v252 = vmax.f32 %v249, %v250
    %v253 = vrot.slane %v245, 3
    %v255 = vmax.f32 %v252, %v253
    %v256 = vrot.slane %v245, 4
    %v258 = vmax.f32 %v255, %v256
    %v259 = vlaneseq
    %v260 = vshrl.u32 %v259, 7
    %v261 = vsub.s32 0, %v260
    %v262 = vrot.slane %v258, %v261
    %v263 = vsub.f32 %v245, %v262
    %v264 = vmul.f32 %v263, 1.442695
    %v265 = vpow.pop %v264
    %v267 = vrot.slane %v265, 1
    %v269 = vadd.f32 %v265, %v267
    %v270 = vrot.slane %v265, 2
    %v272 = vadd.f32 %v269, %v270
    %v273 = vrot.slane %v265, 3
    %v275 = vadd.f32 %v272, %v273
    %v276 = vrot.slane %v265, 4
    %v278 = vadd.f32 %v275, %v276
    %v279 = vlaneseq
    %v280 = vshrl.u32 %v279, 7
    %v281 = vsub.s32 0, %v280
    %v282 = vrot.slane %v278, %v281
    %v283 = vrcp.pop %v282
    %v284 = vmul.f32 %v265, %v283
    %285 = vst [vmem:[#allocation2] sm:$0x1f] %v284
    // Predicated region
    $region22: #{tpu_custom_call.1} parent=1 // pred_check
      _
    $region23: #{tpu_custom_call.1} parent=1 // pred_check_branch
      %287 = sbr.rel (0) target = $region25
    $region24: #{tpu_custom_call.1} parent=1 // pred_region
      %s289 = ssub.s32 128, 128
      %290 = vsyncadd [#allocation3], %s289
      %s292 = sshll.u32 [#allocation2], 4
      %s293 = int_to_ptr.vmem [resolvable:$true] %s292
      %295 = dma.vmem_to_hbm [thread:$0]  %s293, 128, %s5, [#allocation3]
    $region25: #{tpu_custom_call.1} parent=1 // pred_fallthru
      _
    // Predicated region
    $region26: #{tpu_custom_call.1} parent=1 // pred_check
      _
    $region27: #{tpu_custom_call.1} parent=1 // pred_check_branch
      %297 = sbr.rel (0) target = $region29
    $region28: #{tpu_custom_call.1} parent=1 // pred_region
      %298 = dma.done [#allocation3], 128
    $region29: #{tpu_custom_call.1} parent=1 // pred_fallthru
      _
    %299 = vsyncpa [#allocation3], 1

</llo_original>
